<compile_context>
chip_gen: v7x
topology: tpu7x:2x2x1
jax: 0.10.0
libtpu: 0.0.40
codegen_flags: <defaults>
</compile_context>

<pallas_src>
import functools

import jax
import jax.numpy as jnp
from jax import lax
from jax.experimental import pallas as pl
from jax.experimental.pallas import tpu as pltpu

BN_EPS = 1e-5

_VMEM_LIMIT_CACHE = None


def _vmem_limit_bytes():
    """Per-generation scoped-VMEM limit, leaving headroom for compiler scratch."""
    global _VMEM_LIMIT_CACHE
    if _VMEM_LIMIT_CACHE is None:
        cap = 0
        try:
            cap = int(pltpu.get_tpu_info().vmem_capacity_bytes)
        except Exception:
            cap = 0
        if cap <= 0:
            cap = 64 * 1024 * 1024          # conservative fallback (v7x physical)
        _VMEM_LIMIT_CACHE = (cap * 7) // 8  # ~56 MiB on v7x, ~112 MiB on v5e/v6e
    return _VMEM_LIMIT_CACHE


def _pick_tile(d):
    assert d % 128 == 0, f"feature dim {d} must be a multiple of 128"
    for t in (512, 256, 128):
        if d % t == 0:
            return t
    return 128


# ---------------------------------------------------------------------------
# One projector layer: pipelined matmul (K-accumulated) + fused per-branch BN
# ---------------------------------------------------------------------------
def _linear_bn_kernel(x_ref, w_ref, g_ref, b_ref, *rest, half_batch, relu, split):
    """Refs: x (2B, tk) bf16, w (tk, tn) bf16, gamma/beta (1, tn) f32,
    then outputs ((2B, tn) bf16  or  two (B, tn) bf16), then acc (2B, tn) f32.
    BN uses per-branch batch statistics (biased variance, eps=1e-5), folded to
    one scale/shift; optional ReLU; output cast to bf16.
    """
    if split:
        o1_ref, o2_ref, acc_ref = rest
    else:
        o_ref, acc_ref = rest

    k = pl.program_id(1)

    @pl.when(k == 0)
    def _init():
        acc_ref[...] = jnp.zeros_like(acc_ref)

    acc_ref[...] += jnp.dot(x_ref[...], w_ref[...],
                            preferred_element_type=jnp.float32)

    @pl.when(k == pl.num_programs(1) - 1)
    def _bn_epilogue():
        tn = acc_ref.shape[-1]
        # Per-branch view: rows [0:B] = branch 1, [B:2B] = branch 2.
        y = acc_ref[...].reshape(2, half_batch, tn)
        mean = jnp.mean(y, axis=1, keepdims=True)
        var = jnp.mean(jnp.square(y - mean), axis=1, keepdims=True)  # biased
        s = g_ref[...] * lax.rsqrt(var + BN_EPS)          # fold BN -> scale/shift
        t = b_ref[...] - mean * s
        out = y * s + t
        if relu:
            out = jnp.maximum(out, 0.0)
        if split:
            o1_ref[...] = out[0].astype(o1_ref.dtype)
            o2_ref[...] = out[1].astype(o2_ref.dtype)
        else:
            o_ref[...] = out.reshape(2 * half_batch, tn).astype(o_ref.dtype)


def linear_bn_layer(x, w, gamma, beta, *, half_batch, relu, split):
    two_b, k_dim = x.shape
    kw, n_dim = w.shape
    assert kw == k_dim
    tn = _pick_tile(n_dim)
    tk = _pick_tile(k_dim)
    grid = (n_dim // tn, k_dim // tk)

    kernel = functools.partial(_linear_bn_kernel,
                               half_batch=half_batch, relu=relu, split=split)

    in_specs = [
        pl.BlockSpec((two_b, tk), lambda i, k: (0, k)),   # stacked activations
        pl.BlockSpec((tk, tn), lambda i, k: (k, i)),      # weight block
        pl.BlockSpec((1, tn), lambda i, k: (0, i)),       # BN gamma
        pl.BlockSpec((1, tn), lambda i, k: (0, i)),       # BN beta
    ]
    if split:
        out_shape = (jax.ShapeDtypeStruct((half_batch, n_dim), jnp.bfloat16),
                     jax.ShapeDtypeStruct((half_batch, n_dim), jnp.bfloat16))
        out_specs = (pl.BlockSpec((half_batch, tn), lambda i, k: (0, i)),
                     pl.BlockSpec((half_batch, tn), lambda i, k: (0, i)))
    else:
        out_shape = jax.ShapeDtypeStruct((two_b, n_dim), jnp.bfloat16)
        out_specs = pl.BlockSpec((two_b, tn), lambda i, k: (0, i))

    return pl.pallas_call(
        kernel,
        out_shape=out_shape,
        grid=grid,
        in_specs=in_specs,
        out_specs=out_specs,
        scratch_shapes=[pltpu.VMEM((two_b, tn), jnp.float32)],
        compiler_params=pltpu.CompilerParams(
            dimension_semantics=("parallel", "arbitrary"),
            vmem_limit_bytes=_vmem_limit_bytes()),
    )(x, w, gamma, beta)


# ---------------------------------------------------------------------------
# Tiled cross-correlation + Barlow loss partials
# ---------------------------------------------------------------------------
def _corr_loss_kernel(z1_ref, z2_ref, part_ref, acc_ref, diag_ref, *, tile_n):
    i = pl.program_id(0)
    j = pl.program_id(1)

    @pl.when(j == 0)
    def _init():
        acc_ref[...] = jnp.zeros_like(acc_ref)

    z1b = z1_ref[...]                       # (B, tn) bf16
    z2b = z2_ref[...]                       # (B, tn) bf16
    # Raw correlation tile (no /batch here; folded into the JAX epilogue).
    c = lax.dot_general(z1b, z2b,
                        dimension_numbers=(((0,), (0,)), ((), ())),
                        preferred_element_type=jnp.float32)   # (tn, tn)
    csq = c * c
    # Fold rows into the (8, tn) accumulator with pure vreg adds; the cross-lane
    # reduce to a scalar is deferred to the once-per-i-row epilogue.
    acc_ref[...] += jnp.sum(csq.reshape(tile_n // 8, 8, tile_n), axis=0)

    @pl.when(i == j)
    def _diag():
        # Diagonal of this tile, elementwise from the input blocks: O(B*tn).
        prod = z1b.astype(jnp.float32) * z2b.astype(jnp.float32)   # (B, tn)
        diag_raw = jnp.sum(prod, axis=0, keepdims=True)            # (1, tn)
        diag_ref[0] = jnp.sum(diag_raw)                    # sum_i  raw_ii
        diag_ref[1] = jnp.sum(diag_raw * diag_raw)         # sum_i  raw_ii^2

    @pl.when(j == pl.num_programs(1) - 1)
    def _finalize():
        s_all = jnp.sum(acc_ref[...])                      # sum_ij raw_ij^2 (row i)
        lane = lax.broadcasted_iota(jnp.int32, (1, 8, 128), 2)
        sub = lax.broadcasted_iota(jnp.int32, (1, 8, 128), 1)
        tile = jnp.where((sub == 0) & (lane == 0), s_all, 0.0)
        tile = jnp.where((sub == 0) & (lane == 1), diag_ref[0], tile)
        tile = jnp.where((sub == 0) & (lane == 2), diag_ref[1], tile)
        part_ref[...] = tile


def barlow_loss(z1, z2, batch, lambd, scale_factor):
    """z1, z2: (B, D) BN-normalised projections (bf16)."""
    b, d = z1.shape
    assert b == batch and z2.shape == (batch, d)
    assert batch % 8 == 0, "batch must be a multiple of 8"
    tn = _pick_tile(d)
    n_tiles = d // tn

    kernel = functools.partial(_corr_loss_kernel, tile_n=tn)

    # TODO(synk): for production D, keep the full z2 row-block resident (or
    # super-tile the j axis) to avoid re-streaming z2 n_tiles times, and add a
    # batch (K) grid axis when (batch, tn) blocks exceed the v7x VMEM budget.
    parts = pl.pallas_call(
        kernel,
        out_shape=jax.ShapeDtypeStruct((n_tiles, 8, 128), jnp.float32),
        grid=(n_tiles, n_tiles),
        in_specs=[pl.BlockSpec((batch, tn), lambda i, j: (0, i)),
                  pl.BlockSpec((batch, tn), lambda i, j: (0, j))],
        out_specs=pl.BlockSpec((1, 8, 128), lambda i, j: (i, 0, 0)),
        scratch_shapes=[pltpu.VMEM((8, tn), jnp.float32),
                        pltpu.SMEM((2,), jnp.float32)],
        compiler_params=pltpu.CompilerParams(
            dimension_semantics=("parallel", "arbitrary"),
            vmem_limit_bytes=_vmem_limit_bytes()),
    )(z1, z2)

    # Tiny epilogue in plain JAX (inv_batch and the "-1" folded in here).
    inv_b = 1.0 / float(batch)
    s_all = jnp.sum(parts[:, 0, 0])      # sum_ij raw_ij^2
    s_d1 = jnp.sum(parts[:, 0, 1])       # sum_i  raw_ii
    s_d2 = jnp.sum(parts[:, 0, 2])       # sum_i  raw_ii^2
    on_diag = s_d2 * (inv_b * inv_b) - 2.0 * inv_b * s_d1 + float(d)
    off_diag = (s_all - s_d2) * (inv_b * inv_b)
    return scale_factor * (on_diag + lambd * off_diag)


# ---------------------------------------------------------------------------
# BarlowTwins module (parameters + forward glue in plain JAX)
# ---------------------------------------------------------------------------
class BarlowTwinsPallas:
    """Pallas/TPU port of the BarlowTwins projection head + loss forward.

    The backbone / latent extraction is out of scope: like the reference
    forward, this takes the two latent views z1, z2 directly.
    """

    def __init__(self, projection_sizes, lambd, scale_factor=1.0, key=None,
                 param_dtype=jnp.bfloat16):
        self.lambd = float(lambd)
        self.scale_factor = float(scale_factor)
        sizes = list(projection_sizes)
        assert len(sizes) >= 2
        for s in sizes:
            assert s % 128 == 0, "feature sizes must be multiples of 128"
        if key is None:
            key = jax.random.PRNGKey(0)

        self.weights = []   # (in, out) matrices (transposed vs. torch), bf16
        self.gammas = []    # hidden-layer BN scale (1, out), f32
        self.betas = []     # hidden-layer BN shift (1, out), f32
        for i in range(len(sizes) - 1):
            key, wk = jax.random.split(key)
            w = jax.random.normal(wk, (sizes[i], sizes[i + 1]), jnp.float32)
            w = w * (1.0 / jnp.sqrt(jnp.float32(sizes[i])))
            self.weights.append(w.astype(param_dtype))
            if i < len(sizes) - 2:      # hidden layers get affine BN + ReLU
                self.gammas.append(jnp.ones((1, sizes[i + 1]), jnp.float32))
                self.betas.append(jnp.zeros((1, sizes[i + 1]), jnp.float32))

    def __call__(self, z1, z2):
        # TODO(synk): torch BatchNorm also updates running_mean/var buffers in
        # training mode; that side effect does not affect the returned loss and
        # is not reproduced here.
        assert z1.ndim == 2 and z1.shape == z2.shape
        batch = z1.shape[0]
        assert batch % 8 == 0, "batch must be a multiple of 8"
        # Stack the two branches so each weight block is read from HBM once.
        h = jnp.concatenate([z1, z2], axis=0).astype(jnp.bfloat16)   # (2B, D0)
        for i in range(len(self.gammas)):      # hidden Linear -> BN -> ReLU
            h = linear_bn_layer(h, self.weights[i], self.gammas[i], self.betas[i],
                                half_batch=batch, relu=True, split=False)
        # Final bias-free Linear fused with the loss path's affine-free BN.
        d_out = self.weights[-1].shape[1]
        ones = jnp.ones((1, d_out), jnp.float32)
        zeros = jnp.zeros((1, d_out), jnp.float32)
        zp1, zp2 = linear_bn_layer(h, self.weights[-1], ones, zeros,
                                   half_batch=batch, relu=False, split=True)
        return barlow_loss(zp1, zp2, batch, self.lambd, self.scale_factor)


# ---------------------------------------------------------------------------
# Pure-JAX f32 reference (same bf16 parameters, f32 activations everywhere)
# ---------------------------------------------------------------------------
def _reference_loss(model, z1, z2):
    b = z1.shape[0]
    x = jnp.concatenate([z1, z2], axis=0).astype(jnp.bfloat16).astype(jnp.float32)

    def bn(y, g, bb):
        m = jnp.mean(y, axis=0, keepdims=True)
        v = jnp.mean((y - m) ** 2, axis=0, keepdims=True)
        return (y - m) * lax.rsqrt(v + BN_EPS) * g + bb

    h1, h2 = x[:b], x[b:]
    for i in range(len(model.gammas)):
        w = model.weights[i].astype(jnp.float32)
        h1 = jnp.maximum(bn(h1 @ w, model.gammas[i], model.betas[i]), 0.0)
        h2 = jnp.maximum(bn(h2 @ w, model.gammas[i], model.betas[i]), 0.0)
    wl = model.weights[-1].astype(jnp.float32)
    zb1 = bn(h1 @ wl, 1.0, 0.0)
    zb2 = bn(h2 @ wl, 1.0, 0.0)
    c = (zb1.T @ zb2) / b
    d = c.shape[0]
    eye = jnp.eye(d, dtype=jnp.float32)
    on_diag = jnp.sum((jnp.diagonal(c) - 1.0) ** 2)
    off_diag = jnp.sum((c * (1.0 - eye)) ** 2)
    return model.scale_factor * (on_diag + model.lambd * off_diag)


# ---------------------------------------------------------------------------
if __name__ == "__main__":
    # Small demo sizes: batch multiple of 8, feature sizes multiples of 128.
    # (For real MXU utilization use batch >= 128; kept small here per spec.)
    B = 8
    projection_sizes = [128, 256, 384]   # final D=384 -> 3x3 correlation grid
    lambd = 0.005
    scale_factor = 1.0

    key = jax.random.PRNGKey(0)
    k1, k2, kparams = jax.random.split(key, 3)
    z1 = jax.random.normal(k1, (B, projection_sizes[0]), jnp.float32)
    z2 = jax.random.normal(k2, (B, projection_sizes[0]), jnp.float32)

    model = BarlowTwinsPallas(projection_sizes, lambd, scale_factor, key=kparams)
    loss = model(z1, z2)
    jax.block_until_ready(loss)

    assert loss.shape == ()
    assert bool(jnp.isfinite(loss))

    # Loose-tolerance check against the f32 JAX reference (bf16 staging drift).
    ref = _reference_loss(model, z1, z2)
    rel = abs(float(loss) - float(ref)) / max(abs(float(ref)), 1e-6)
    assert rel < 0.1, f"relative error vs reference too large: {rel}"

    print("KERNEL_OK")
</pallas_src>

<mosaic_0001>
module attributes {stable_mosaic.version = 11 : i64} {
  func.func @_linear_bn_kernel(%arg0: i32, %arg1: i32, %arg2: memref<16x128xbf16, #tpu.memory_space<vmem>>, %arg3: memref<128x256xbf16, #tpu.memory_space<vmem>>, %arg4: memref<1x256xf32, #tpu.memory_space<vmem>>, %arg5: memref<1x256xf32, #tpu.memory_space<vmem>>, %arg6: memref<16x256xbf16, #tpu.memory_space<vmem>>, %arg7: memref<16x256xf32, #tpu.memory_space<vmem>>) attributes {dimension_semantics = [#tpu.dimension_semantics<parallel>, #tpu.dimension_semantics<arbitrary>], iteration_bounds = array<i64: 1, 1>, scalar_prefetch = 0 : i64, scratch_operands = 1 : i64, tpu.core_type = #tpu.core_type<tc>, window_params = [{transform_indices = @transform_0, window_bounds = array<i64: 16, 128>}, {transform_indices = @transform_1, window_bounds = array<i64: 128, 256>}, {transform_indices = @transform_2, window_bounds = array<i64: 1, 256>}, {transform_indices = @transform_3, window_bounds = array<i64: 1, 256>}, {transform_indices = @transform_4, window_bounds = array<i64: 16, 256>}]} {
    %c0_i32 = arith.constant 0 : i32
    %0 = arith.cmpi eq, %arg1, %c0_i32 : i32
    %1 = arith.extui %0 : i1 to i32
    %c0_i32_0 = arith.constant 0 : i32
    %2 = arith.cmpi ne, %1, %c0_i32_0 : i32
    scf.if %2 {
      %cst_10 = arith.constant 0.000000e+00 : f32
      %12 = vector.broadcast %cst_10 : f32 to vector<16x256xf32>
      %c0_11 = arith.constant 0 : index
      %c0_12 = arith.constant 0 : index
      %13 = vector.load %arg7[%c0_11, %c0_12] : memref<16x256xf32, #tpu.memory_space<vmem>>, vector<16x256xf32>
      tpu.vector_store %arg7[%c0_11, %c0_12], %12 {strides = array<i32>} : memref<16x256xf32, #tpu.memory_space<vmem>>, vector<16x256xf32>,
    } else {
    }
    %c0 = arith.constant 0 : index
    %c0_1 = arith.constant 0 : index
    %3 = vector.load %arg7[%c0, %c0_1] : memref<16x256xf32, #tpu.memory_space<vmem>>, vector<16x256xf32>
    %c0_2 = arith.constant 0 : index
    %c0_3 = arith.constant 0 : index
    %4 = vector.load %arg2[%c0_2, %c0_3] : memref<16x128xbf16, #tpu.memory_space<vmem>>, vector<16x128xbf16>
    %c0_4 = arith.constant 0 : index
    %c0_5 = arith.constant 0 : index
    %5 = vector.load %arg3[%c0_4, %c0_5] : memref<128x256xbf16, #tpu.memory_space<vmem>>, vector<128x256xbf16>
    %cst = arith.constant dense<0.000000e+00> : vector<16x256xf32>
    %6 = tpu.matmul %4, %5, %cst {dimension_numbers = #tpu.dot_dimension_numbers<[1], [0], [0], [1], [0, 0, 1, 1], [], []>} : vector<16x128xbf16>, vector<128x256xbf16>, vector<16x256xf32> -> vector<16x256xf32>
    %7 = arith.addf %3, %6 : vector<16x256xf32>
    %c0_6 = arith.constant 0 : index
    %c0_7 = arith.constant 0 : index
    %8 = vector.load %arg7[%c0_6, %c0_7] : memref<16x256xf32, #tpu.memory_space<vmem>>, vector<16x256xf32>
    tpu.vector_store %arg7[%c0_6, %c0_7], %7 {strides = array<i32>} : memref<16x256xf32, #tpu.memory_space<vmem>>, vector<16x256xf32>,
    %c0_i32_8 = arith.constant 0 : i32
    %9 = arith.cmpi eq, %arg1, %c0_i32_8 : i32
    %10 = arith.extui %9 : i1 to i32
    %c0_i32_9 = arith.constant 0 : i32
    %11 = arith.cmpi ne, %10, %c0_i32_9 : i32
    scf.if %11 {
      %c0_10 = arith.constant 0 : index
      %c0_11 = arith.constant 0 : index
      %12 = vector.load %arg7[%c0_10, %c0_11] : memref<16x256xf32, #tpu.memory_space<vmem>>, vector<16x256xf32>
      %13 = vector.shape_cast %12 : vector<16x256xf32> to vector<2x8x256xf32>
      %cst_12 = arith.constant dense<0.000000e+00> : vector<2x256xf32>
      %14 = vector.multi_reduction <add>, %13, %cst_12 [1] : vector<2x8x256xf32> to vector<2x256xf32>
      %15 = vector.shape_cast %14 : vector<2x256xf32> to vector<2x1x256xf32>
      %cst_13 = arith.constant 8.000000e+00 : f32
      %16 = vector.broadcast %cst_13 : f32 to vector<2x1x256xf32>
      %17 = arith.divf %15, %16 : vector<2x1x256xf32>
      %18 = vector.broadcast %17 : vector<2x1x256xf32> to vector<2x8x256xf32>
      %19 = arith.subf %13, %18 : vector<2x8x256xf32>
      %20 = arith.mulf %19, %19 : vector<2x8x256xf32>
      %cst_14 = arith.constant dense<0.000000e+00> : vector<2x256xf32>
      %21 = vector.multi_reduction <add>, %20, %cst_14 [1] : vector<2x8x256xf32> to vector<2x256xf32>
      %22 = vector.shape_cast %21 : vector<2x256xf32> to vector<2x1x256xf32>
      %cst_15 = arith.constant 8.000000e+00 : f32
      %23 = vector.broadcast %cst_15 : f32 to vector<2x1x256xf32>
      %24 = arith.divf %22, %23 : vector<2x1x256xf32>
      %c0_16 = arith.constant 0 : index
      %c0_17 = arith.constant 0 : index
      %25 = vector.load %arg4[%c0_16, %c0_17] : memref<1x256xf32, #tpu.memory_space<vmem>>, vector<1x256xf32>
      %cst_18 = arith.constant 9.99999974E-6 : f32
      %26 = vector.broadcast %cst_18 : f32 to vector<2x1x256xf32>
      %27 = arith.addf %24, %26 : vector<2x1x256xf32>
      %28 = math.rsqrt %27 : vector<2x1x256xf32>
      %29 = vector.shape_cast %25 : vector<1x256xf32> to vector<1x1x256xf32>
      %30 = vector.broadcast %29 : vector<1x1x256xf32> to vector<2x1x256xf32>
      %31 = arith.mulf %30, %28 : vector<2x1x256xf32>
      %c0_19 = arith.constant 0 : index
      %c0_20 = arith.constant 0 : index
      %32 = vector.load %arg5[%c0_19, %c0_20] : memref<1x256xf32, #tpu.memory_space<vmem>>, vector<1x256xf32>
      %33 = arith.mulf %17, %31 : vector<2x1x256xf32>
      %34 = vector.shape_cast %32 : vector<1x256xf32> to vector<1x1x256xf32>
      %35 = vector.broadcast %34 : vector<1x1x256xf32> to vector<2x1x256xf32>
      %36 = arith.subf %35, %33 : vector<2x1x256xf32>
      %37 = vector.broadcast %31 : vector<2x1x256xf32> to vector<2x8x256xf32>
      %38 = arith.mulf %13, %37 : vector<2x8x256xf32>
      %39 = vector.broadcast %36 : vector<2x1x256xf32> to vector<2x8x256xf32>
      %40 = arith.addf %38, %39 : vector<2x8x256xf32>
      %cst_21 = arith.constant 0.000000e+00 : f32
      %41 = vector.broadcast %cst_21 : f32 to vector<2x8x256xf32>
      %42 = arith.maximumf %40, %41 : vector<2x8x256xf32>
      %43 = vector.shape_cast %42 : vector<2x8x256xf32> to vector<16x256xf32>
      %44 = arith.truncf %43 : vector<16x256xf32> to vector<16x256xbf16>
      %c0_22 = arith.constant 0 : index
      %c0_23 = arith.constant 0 : index
      %45 = vector.load %arg6[%c0_22, %c0_23] : memref<16x256xbf16, #tpu.memory_space<vmem>>, vector<16x256xbf16>
      tpu.vector_store %arg6[%c0_22, %c0_23], %44 {strides = array<i32>} : memref<16x256xbf16, #tpu.memory_space<vmem>>, vector<16x256xbf16>,
    } else {
    }
    return
  }
  func.func @transform_0(%arg0: i32, %arg1: i32) -> (i32, i32) {
    %c0_i32 = arith.constant 0 : i32
    %c0_i32_0 = arith.constant 0 : i32
    return %c0_i32, %arg1 : i32, i32
  }
  func.func @transform_1(%arg0: i32, %arg1: i32) -> (i32, i32) {
    %c0_i32 = arith.constant 0 : i32
    return %arg1, %arg0 : i32, i32
  }
  func.func @transform_2(%arg0: i32, %arg1: i32) -> (i32, i32) {
    %c0_i32 = arith.constant 0 : i32
    %c0_i32_0 = arith.constant 0 : i32
    return %c0_i32, %arg0 : i32, i32
  }
  func.func @transform_3(%arg0: i32, %arg1: i32) -> (i32, i32) {
    %c0_i32 = arith.constant 0 : i32
    %c0_i32_0 = arith.constant 0 : i32
    return %c0_i32, %arg0 : i32, i32
  }
  func.func @transform_4(%arg0: i32, %arg1: i32) -> (i32, i32) {
    %c0_i32 = arith.constant 0 : i32
    %c0_i32_0 = arith.constant 0 : i32
    return %c0_i32, %arg0 : i32, i32
  }
}

</mosaic_0001>

<llo_original>
// kernel: tpu_custom_call.1
$region0: #{tpu_custom_call.1}
  #allocation0 [shape = 'u32[]', space=smem, size = 0x4, offset = 0x4, fixed_abs, tag = 'smem constant byte address 0x4 - core index']
  #allocation1 [shape = 'u32[144,128]{1,0:T(1,128)}', space=vmem, size = 0x12000, scoped, tag = 'internal scratch']
  #allocation2 [shape = 'f32[16,256]{1,0:T(8,128)}', space=vmem, size = 0x4000, scoped, tag = 'scratch operand']
  %s0 = inlined_call_operand.hbm [shape: bf16[16,128], index: 0, kind: input, shape index: {}]
  %s1 = inlined_call_operand.hbm [shape: bf16[128,256], index: 1, kind: input, shape index: {}]
  %s2 = inlined_call_operand.vmem [shape: f32[1,256], index: 2, kind: input, shape index: {}]
  %s3 = inlined_call_operand.vmem [shape: f32[1,256], index: 3, kind: input, shape index: {}]
  %s4 = inlined_call_operand.hbm [shape: bf16[16,256], index: 4, kind: output, shape index: {}]
  %s5 = sld [smem:[#allocation0]]
  $region42: #{tpu_custom_call.1} parent=0
    _
  %s7 = ssub.s32 1, %s5
  %s8 = scalar_select 0, %s7, %s5
  $region1: #{tpu_custom_call.1} parent=0
    #allocation3 [shape = 'u8[4096]{0}', space=vmem, size = 0x1000, scoped, tag = 'input window, operand 0, single buffered']
    #allocation4 [shape = 's32[1]{0}', space=sflag, size = 0x4, scoped, tag = 'scoped memory for tpu_custom_call.1']
    #allocation5 [shape = 's32[1]{0}', space=sflag, size = 0x4, scoped, tag = 'scoped memory for tpu_custom_call.1']
    #allocation6 [shape = 'u8[65536]{0}', space=vmem, size = 0x10000, scoped, tag = 'input window, operand 1, single buffered']
    #allocation7 [shape = 's32[1]{0}', space=sflag, size = 0x4, scoped, tag = 'scoped memory for tpu_custom_call.1']
    #allocation8 [shape = 'u8[8192]{0}', space=vmem, size = 0x2000, scoped, tag = 'output window, operand 0, single buffered']
    %9 = vsyncpa [#allocation4], 0
    %10 = vsyncpa [#allocation7], 0
    %11 = vsyncpa [#allocation5], 0
    // Predicated region
    $region2: #{tpu_custom_call.1} parent=1 // pred_check
      _
    $region3: #{tpu_custom_call.1} parent=1 // pred_check_branch
      %13 = sbr.rel (0) target = $region5
    $region4: #{tpu_custom_call.1} parent=1 // pred_region
      %s15 = ssub.s32 128, 128
      %16 = vsyncadd [#allocation4], %s15
      %s17 = sshll.u32 [#allocation3], 4
      %s18 = int_to_ptr.vmem [resolvable:$true] %s17
      %23 = dma.hbm_to_vmem [thread:$0]  %s0, 128, %s18, [#allocation4], 64, 64, 4
    $region5: #{tpu_custom_call.1} parent=1 // pred_fallthru
      _
    // Predicated region
    $region6: #{tpu_custom_call.1} parent=1 // pred_check
      _
    $region7: #{tpu_custom_call.1} parent=1 // pred_check_branch
      %25 = sbr.rel (0) target = $region9
    $region8: #{tpu_custom_call.1} parent=1 // pred_region
      %s27 = ssub.s32 2048, 2048
      %28 = vsyncadd [#allocation7], %s27
      %s29 = sshll.u32 [#allocation6], 4
      %s30 = int_to_ptr.vmem [resolvable:$true] %s29
      %35 = dma.hbm_to_vmem [thread:$0]  %s1, 2048, %s30, [#allocation7], 128, 128, 8
    $region9: #{tpu_custom_call.1} parent=1 // pred_fallthru
      _
    // Predicated region
    $region10: #{tpu_custom_call.1} parent=1 // pred_check
      _
    $region11: #{tpu_custom_call.1} parent=1 // pred_check_branch
      %37 = sbr.rel (0) target = $region13
    $region12: #{tpu_custom_call.1} parent=1 // pred_region
      _
    $region13: #{tpu_custom_call.1} parent=1 // pred_fallthru
      _
    // Predicated region
    $region14: #{tpu_custom_call.1} parent=1 // pred_check
      _
    $region15: #{tpu_custom_call.1} parent=1 // pred_check_branch
      %39 = sbr.rel (0) target = $region17
    $region16: #{tpu_custom_call.1} parent=1 // pred_region
      _
    $region17: #{tpu_custom_call.1} parent=1 // pred_fallthru
      _
    // Predicated region
    $region18: #{tpu_custom_call.1} parent=1 // pred_check
      _
    $region19: #{tpu_custom_call.1} parent=1 // pred_check_branch
      %41 = sbr.rel (0) target = $region21
    $region20: #{tpu_custom_call.1} parent=1 // pred_region
      %42 = dma.done [#allocation4], 128
    $region21: #{tpu_custom_call.1} parent=1 // pred_fallthru
      _
    // Predicated region
    $region22: #{tpu_custom_call.1} parent=1 // pred_check
      _
    $region23: #{tpu_custom_call.1} parent=1 // pred_check_branch
      %44 = sbr.rel (0) target = $region25
    $region24: #{tpu_custom_call.1} parent=1 // pred_region
      %45 = dma.done [#allocation7], 2048
    $region25: #{tpu_custom_call.1} parent=1 // pred_fallthru
      _
    %p47 = scmp.eq.s32.totalorder 0, 0
    // Predicated region
    $region26: #{tpu_custom_call.1} parent=1 // pred_check
      %p48 = pneg %p47
    $region27: #{tpu_custom_call.1} parent=1 // pred_check_branch
      %50 = sbr.rel (%p48) target = $region29
    $region28: #{tpu_custom_call.1} parent=1 // pred_region
      %51 = vst [vmem:[#allocation2] sm:$0xff] 0.0
      %52 = vst [vmem:[#allocation2 + $0x8] sm:$0xff] 0.0
      %53 = vst [vmem:[#allocation2 + $0x10] sm:$0xff] 0.0
      %54 = vst [vmem:[#allocation2 + $0x18] sm:$0xff] 0.0
    $region29: #{tpu_custom_call.1} parent=1 // pred_fallthru
      _
    %v55 = vld [vmem:[#allocation2] sm:$0xff]
    %v56 = vld [vmem:[#allocation2 + $0x8] sm:$0xff]
    %v57 = vld [vmem:[#allocation2 + $0x10] sm:$0xff]
    %v58 = vld [vmem:[#allocation2 + $0x18] sm:$0xff]
    %v59 = vld [vmem:[#allocation3] sm:$0xf]
    %v60 = vld [vmem:[#allocation3 + $0x4] sm:$0xf]
    %v61 = vld [vmem:[#allocation6] sm:$0xff]
    %v62 = vld [vmem:[#allocation6 + $0x8] sm:$0xff]
    %v63 = vld [vmem:[#allocation6 + $0x10] sm:$0xff]
    %v64 = vld [vmem:[#allocation6 + $0x18] sm:$0xff]
    %v65 = vld [vmem:[#allocation6 + $0x20] sm:$0xff]
    %v66 = vld [vmem:[#allocation6 + $0x28] sm:$0xff]
    %v67 = vld [vmem:[#allocation6 + $0x30] sm:$0xff]
    %v68 = vld [vmem:[#allocation6 + $0x38] sm:$0xff]
    %v69 = vld [vmem:[#allocation6 + $0x40] sm:$0xff]
    %v70 = vld [vmem:[#allocation6 + $0x48] sm:$0xff]
    %v71 = vld [vmem:[#allocation6 + $0x50] sm:$0xff]
    %v72 = vld [vmem:[#allocation6 + $0x58] sm:$0xff]
    %v73 = vld [vmem:[#allocation6 + $0x60] sm:$0xff]
    %v74 = vld [vmem:[#allocation6 + $0x68] sm:$0xff]
    %v75 = vld [vmem:[#allocation6 + $0x70] sm:$0xff]
    %v76 = vld [vmem:[#allocation6 + $0x78] sm:$0xff]
    %v79 = vunpack.c.l.b16 %v59
    %v80 = vunpack.c.l.b16 %v60
    %v81 = vpack.c.b16 %v80, %v79
    %v99 = vunpack.c.l.b16 %v61
    %v100 = vunpack.c.h.b16 %v61
    %v101 = vunpack.c.l.b16 %v62
    %v102 = vunpack.c.h.b16 %v62
    %v103 = vunpack.c.l.b16 %v63
    %v104 = vunpack.c.h.b16 %v63
    %v105 = vunpack.c.l.b16 %v64
    %v106 = vunpack.c.h.b16 %v64
    %v107 = vunpack.c.l.b16 %v65
    %v108 = vunpack.c.h.b16 %v65
    %v109 = vunpack.c.l.b16 %v66
    %v110 = vunpack.c.h.b16 %v66
    %v111 = vunpack.c.l.b16 %v67
    %v112 = vunpack.c.h.b16 %v67
    %v113 = vunpack.c.l.b16 %v68
    %v114 = vunpack.c.h.b16 %v68
    %v115 = vunpack.c.l.b16 %v69
    %v116 = vunpack.c.h.b16 %v69
    %v117 = vunpack.c.l.b16 %v70
    %v118 = vunpack.c.h.b16 %v70
    %v119 = vunpack.c.l.b16 %v71
    %v120 = vunpack.c.h.b16 %v71
    %v121 = vunpack.c.l.b16 %v72
    %v122 = vunpack.c.h.b16 %v72
    %v123 = vunpack.c.l.b16 %v73
    %v124 = vunpack.c.h.b16 %v73
    %v125 = vunpack.c.l.b16 %v74
    %v126 = vunpack.c.h.b16 %v74
    %v127 = vunpack.c.l.b16 %v75
    %v128 = vunpack.c.h.b16 %v75
    %v129 = vunpack.c.l.b16 %v76
    %v130 = vunpack.c.h.b16 %v76
    %v131 = vpack.c.b16 %v101, %v99
    %v132 = vpack.c.b16 %v102, %v100
    %v133 = vpack.c.b16 %v105, %v103
    %v134 = vpack.c.b16 %v106, %v104
    %v135 = vpack.c.b16 %v109, %v107
    %v136 = vpack.c.b16 %v110, %v108
    %v137 = vpack.c.b16 %v113, %v111
    %v138 = vpack.c.b16 %v114, %v112
    %v139 = vpack.c.b16 %v117, %v115
    %v140 = vpack.c.b16 %v118, %v116
    %v141 = vpack.c.b16 %v121, %v119
    %v142 = vpack.c.b16 %v122, %v120
    %v143 = vpack.c.b16 %v125, %v123
    %v144 = vpack.c.b16 %v126, %v124
    %v145 = vpack.c.b16 %v129, %v127
    %v146 = vpack.c.b16 %v130, %v128
    %163 = vmatprep.subr.bf16.mxu0 %v132
    %164 = vmatpush1.bf16.msra.mxu0 %v131
    %165 = vmatprep.subr.bf16.mxu0 %v134
    %166 = vmatpush1.bf16.msra.mxu0 %v133
    %167 = vmatprep.subr.bf16.mxu0 %v136
    %168 = vmatpush1.bf16.msra.mxu0 %v135
    %169 = vmatprep.subr.bf16.mxu0 %v138
    %170 = vmatpush1.bf16.msra.mxu0 %v137
    %171 = vmatprep.subr.bf16.mxu0 %v140
    %172 = vmatpush1.bf16.msra.mxu0 %v139
    %173 = vmatprep.subr.bf16.mxu0 %v142
    %174 = vmatpush1.bf16.msra.mxu0 %v141
    %175 = vmatprep.subr.bf16.mxu0 %v144
    %176 = vmatpush1.bf16.msra.mxu0 %v143
    %177 = vmatprep.subr.bf16.mxu0 %v146
    %178 = vmatpush1.bf16.msra.mxu0 %v145
    %179 = vmatprep.subr.bf16.mxu0 0
    %180 = vmatpush1.bf16.msra.mxu0 0
    %181 = vmatprep.subr.bf16.mxu0 0
    %182 = vmatpush1.bf16.msra.mxu0 0
    %183 = vmatprep.subr.bf16.mxu0 0
    %184 = vmatpush1.bf16.msra.mxu0 0
    %185 = vmatprep.subr.bf16.mxu0 0
    %186 = vmatpush1.bf16.msra.mxu0 0
    %187 = vmatprep.subr.bf16.mxu0 0
    %188 = vmatpush1.bf16.msra.mxu0 0
    %189 = vmatprep.subr.bf16.mxu0 0
    %190 = vmatpush1.bf16.msra.mxu0 0
    %191 = vmatprep.subr.bf16.mxu0 0
    %192 = vmatpush1.bf16.msra.mxu0 0
    %193 = vmatprep.subr.bf16.mxu0 0
    %194 = vmatpush1.bf16.msra.mxu0 0
    %195 = vmatprep.mubr.bf16.mxu0 0
    %196 = vmatmul.mubr.bf16.gmra.mrb[0].mxu0 %v81
    %v197 = vpop.f32.mrb[0].mxu0
    %v198 = vadd.f32 0.0, %v197
    %v199 = vpop.f32.mrb[0].mxu0
    %v200 = vadd.f32 0.0, %v199
    %v201 = vpop.f32.mrb[0].mxu0
    %v202 = vadd.f32 0.0, %v201
    %v203 = vpop.f32.mrb[0].mxu0
    %v204 = vadd.f32 0.0, %v203
    %205 = vdwg.mxu0
    %v206 = vadd.f32 %v55, %v198
    %v207 = vadd.f32 %v56, %v200
    %v208 = vadd.f32 %v57, %v202
    %v209 = vadd.f32 %v58, %v204
    %210 = vst [vmem:[#allocation2] sm:$0xff] %v206
    %211 = vst [vmem:[#allocation2 + $0x8] sm:$0xff] %v207
    %212 = vst [vmem:[#allocation2 + $0x10] sm:$0xff] %v208
    %213 = vst [vmem:[#allocation2 + $0x18] sm:$0xff] %v209
    // Predicated region
    $region30: #{tpu_custom_call.1} parent=1 // pred_check
      %p214 = pneg %p47
    $region31: #{tpu_custom_call.1} parent=1 // pred_check_branch
      %216 = sbr.rel (%p214) target = $region33
    $region32: #{tpu_custom_call.1} parent=1 // pred_region
      %v217 = vld [vmem:[#allocation2] sm:$0xff]
      %v218 = vld [vmem:[#allocation2 + $0x8] sm:$0xff]
      %v219 = vld [vmem:[#allocation2 + $0x10] sm:$0xff]
      %v220 = vld [vmem:[#allocation2 + $0x18] sm:$0xff]
      %v221 = vrot.slane %v217, 4
      %v222 = vadd.f32 %v217, %v221
      %v223 = vrot.slane %v222, 2
      %v224 = vadd.f32 %v222, %v223
      %v225 = vrot.slane %v224, 1
      %v226 = vadd.f32 %v224, %v225
      %v227 = vrot.slane %v218, 4
      %v228 = vadd.f32 %v218, %v227
      %v229 = vrot.slane %v228, 2
      %v230 = vadd.f32 %v228, %v229
      %v231 = vrot.slane %v230, 1
      %v232 = vadd.f32 %v230, %v231
      %v233 = vrot.slane %v219, 4
      %v234 = vadd.f32 %v219, %v233
      %v235 = vrot.slane %v234, 2
      %v236 = vadd.f32 %v234, %v235
      %v237 = vrot.slane %v236, 1
      %v238 = vadd.f32 %v236, %v237
      %v239 = vrot.slane %v220, 4
      %v240 = vadd.f32 %v220, %v239
      %v241 = vrot.slane %v240, 2
      %v242 = vadd.f32 %v240, %v241
      %v243 = vrot.slane %v242, 1
      %v244 = vadd.f32 %v242, %v243
      %v245 = vrcp.pop 8.0
      %v246 = vmul.f32 %v226, %v245
      %v247 = vmul.f32 %v232, %v245
      %v248 = vmul.f32 %v238, %v245
      %v249 = vmul.f32 %v244, %v245
      %v250 = vsub.f32 %v217, %v246
      %v251 = vsub.f32 %v218, %v247
      %v252 = vsub.f32 %v219, %v248
      %v253 = vsub.f32 %v220, %v249
      %v254 = vmul.f32 %v250, %v250
      %v255 = vmul.f32 %v251, %v251
      %v256 = vmul.f32 %v252, %v252
      %v257 = vmul.f32 %v253, %v253
      %v258 = vrot.slane %v254, 4
      %v259 = vadd.f32 %v254, %v258
      %v260 = vrot.slane %v259, 2
      %v261 = vadd.f32 %v259, %v260
      %v262 = vrot.slane %v261, 1
      %v263 = vadd.f32 %v261, %v262
      %v264 = vrot.slane %v255, 4
      %v265 = vadd.f32 %v255, %v264
      %v266 = vrot.slane %v265, 2
      %v267 = vadd.f32 %v265, %v266
      %v268 = vrot.slane %v267, 1
      %v269 = vadd.f32 %v267, %v268
      %v270 = vrot.slane %v256, 4
      %v271 = vadd.f32 %v256, %v270
      %v272 = vrot.slane %v271, 2
      %v273 = vadd.f32 %v271, %v272
      %v274 = vrot.slane %v273, 1
      %v275 = vadd.f32 %v273, %v274
      %v276 = vrot.slane %v257, 4
      %v277 = vadd.f32 %v257, %v276
      %v278 = vrot.slane %v277, 2
      %v279 = vadd.f32 %v277, %v278
      %v280 = vrot.slane %v279, 1
      %v281 = vadd.f32 %v279, %v280
      %v282 = vmul.f32 %v263, %v245
      %v283 = vmul.f32 %v269, %v245
      %v284 = vmul.f32 %v275, %v245
      %v285 = vmul.f32 %v281, %v245
      %v286 = vld [vmem:[%s2] sm:$0x3]
      %v287 = vadd.f32 %v282, 1e-05
      %v288 = vadd.f32 %v283, 1e-05
      %v289 = vadd.f32 %v284, 1e-05
      %v290 = vadd.f32 %v285, 1e-05
      %v291 = vrsqrt.pop %v287
      %v292 = vrsqrt.pop %v288
      %v293 = vrsqrt.pop %v289
      %v294 = vrsqrt.pop %v290
      %v299 = vcombine.low %v291, %v292
      %v301 = vunpack.c.l.s4 1966171168
      %v302 = vunpack.c.0.s8 %v301
      %v303 = vlaneseq
      %v304 = vshrl.u32 %v303, 7
      %v305 = vsub.s32 %v302, %v304
      %v306 = vrot.slane %v299, %v305
      %v308 = vunpack.c.l.s4 1966171168
      %v309 = vunpack.c.0.s8 %v308
      %v310 = vlaneseq
      %v311 = vshrl.u32 %v310, 7
      %v312 = vsub.s32 %v309, %v311
      %v313 = vrot.slane %v306, %v312
      %v314 = vcombine.low %v293, %v294
      %v316 = vunpack.c.l.s4 1966171168
      %v317 = vunpack.c.0.s8 %v316
      %v318 = vlaneseq
      %v319 = vshrl.u32 %v318, 7
      %v320 = vsub.s32 %v317, %v319
      %v321 = vrot.slane %v314, %v320
      %v323 = vunpack.c.l.s4 1966171168
      %v324 = vunpack.c.0.s8 %v323
      %v325 = vlaneseq
      %v326 = vshrl.u32 %v325, 7
      %v327 = vsub.s32 %v324, %v326
      %v328 = vrot.slane %v321, %v327
      %v331 = vmul.f32 %v286, %v313
      %v332 = vmul.f32 %v286, %v328
      %v333 = vld [vmem:[%s3] sm:$0x3]
      %v336 = vlaneseq
      %v337 = vshrl.u32 %v336, 7
      %v338 = vsub.s32 0, %v337
      %v339 = vrot.slane %v331, %v338
      %v340 = vlaneseq
      %v341 = vshrl.u32 %v340, 7
      %v342 = vsub.s32 1, %v341
      %v343 = vrot.slane %v331, %v342
      %v344 = vlaneseq
      %v345 = vshrl.u32 %v344, 7
      %v346 = vsub.s32 0, %v345
      %v347 = vrot.slane %v332, %v346
      %v348 = vlaneseq
      %v349 = vshrl.u32 %v348, 7
      %v350 = vsub.s32 1, %v349
      %v351 = vrot.slane %v332, %v350
      %v356 = vmul.f32 %v246, %v339
      %v357 = vmul.f32 %v247, %v343
      %v358 = vmul.f32 %v248, %v347
      %v359 = vmul.f32 %v249, %v351
      %v364 = vcombine.low %v356, %v357
      %v366 = vunpack.c.l.s4 1966171168
      %v367 = vunpack.c.0.s8 %v366
      %v368 = vlaneseq
      %v369 = vshrl.u32 %v368, 7
      %v370 = vsub.s32 %v367, %v369
      %v371 = vrot.slane %v364, %v370
      %v373 = vunpack.c.l.s4 1966171168
      %v374 = vunpack.c.0.s8 %v373
      %v375 = vlaneseq
      %v376 = vshrl.u32 %v375, 7
      %v377 = vsub.s32 %v374, %v376
      %v378 = vrot.slane %v371, %v377
      %v379 = vcombine.low %v358, %v359
      %v381 = vunpack.c.l.s4 1966171168
      %v382 = vunpack.c.0.s8 %v381
      %v383 = vlaneseq
      %v384 = vshrl.u32 %v383, 7
      %v385 = vsub.s32 %v382, %v384
      %v386 = vrot.slane %v379, %v385
      %v388 = vunpack.c.l.s4 1966171168
      %v389 = vunpack.c.0.s8 %v388
      %v390 = vlaneseq
      %v391 = vshrl.u32 %v390, 7
      %v392 = vsub.s32 %v389, %v391
      %v393 = vrot.slane %v386, %v392
      %v396 = vsub.f32 %v333, %v378
      %v397 = vsub.f32 %v333, %v393
      %v398 = vmul.f32 %v217, %v339
      %v399 = vmul.f32 %v218, %v343
      %v400 = vmul.f32 %v219, %v347
      %v401 = vmul.f32 %v220, %v351
      %v404 = vlaneseq
      %v405 = vshrl.u32 %v404, 7
      %v406 = vsub.s32 0, %v405
      %v407 = vrot.slane %v396, %v406
      %v408 = vlaneseq
      %v409 = vshrl.u32 %v408, 7
      %v410 = vsub.s32 1, %v409
      %v411 = vrot.slane %v396, %v410
      %v412 = vlaneseq
      %v413 = vshrl.u32 %v412, 7
      %v414 = vsub.s32 0, %v413
      %v415 = vrot.slane %v397, %v414
      %v416 = vlaneseq
      %v417 = vshrl.u32 %v416, 7
      %v418 = vsub.s32 1, %v417
      %v419 = vrot.slane %v397, %v418
      %v424 = vadd.f32 %v398, %v407
      %v425 = vadd.f32 %v399, %v411
      %v426 = vadd.f32 %v400, %v415
      %v427 = vadd.f32 %v401, %v419
      %v428 = vmax.f32 %v424, 0.0
      %v429 = vmax.f32 %v425, 0.0
      %v430 = vmax.f32 %v426, 0.0
      %v431 = vmax.f32 %v427, 0.0
      %v432 = vpack.c.bf16 %v430, %v428
      %v433 = vpack.c.bf16 %v431, %v429
      %v436 = vunpack.c.l.b16 %v432
      %v437 = vunpack.c.l.b16 %v433
      %v438 = vunpack.c.h.b16 %v432
      %v439 = vunpack.c.h.b16 %v433
      %v440 = vpack.c.b16 %v437, %v436
      %v441 = vpack.c.b16 %v439, %v438
      %444 = vst [vmem:[#allocation8] sm:$0xff] %v440
      %445 = vst [vmem:[#allocation8 + $0x8] sm:$0xff] %v441
    $region33: #{tpu_custom_call.1} parent=1 // pred_fallthru
      _
    // Predicated region
    $region34: #{tpu_custom_call.1} parent=1 // pred_check
      _
    $region35: #{tpu_custom_call.1} parent=1 // pred_check_branch
      %447 = sbr.rel (0) target = $region37
    $region36: #{tpu_custom_call.1} parent=1 // pred_region
      %s449 = ssub.s32 256, 256
      %450 = vsyncadd [#allocation5], %s449
      %s451 = sshll.u32 [#allocation8], 4
      %s452 = int_to_ptr.vmem [resolvable:$true] %s451
      %457 = dma.vmem_to_hbm [thread:$0]  %s452, 256, %s4, [#allocation5], 128, 128, 8
    $region37: #{tpu_custom_call.1} parent=1 // pred_fallthru
      _
    // Predicated region
    $region38: #{tpu_custom_call.1} parent=1 // pred_check
      _
    $region39: #{tpu_custom_call.1} parent=1 // pred_check_branch
      %459 = sbr.rel (0) target = $region41
    $region40: #{tpu_custom_call.1} parent=1 // pred_region
      %460 = dma.done [#allocation5], 256
    $region41: #{tpu_custom_call.1} parent=1 // pred_fallthru
      _
    %461 = vsyncpa [#allocation4], 1
    %462 = vsyncpa [#allocation7], 1
    %463 = vsyncpa [#allocation5], 1

</llo_original>
